<compile_context>
chip_gen: v6e
topology: v6e:2x2x1
jax: 0.10.0
libtpu: 0.0.40
codegen_flags: <defaults>
</compile_context>

<pallas_src>
import functools

import jax
import jax.numpy as jnp
from jax.experimental import pallas as pl
from jax.experimental.pallas import tpu as pltpu


def _basic_block_kernel(x_ref, w1_ref, s1_ref, b1_ref, w2_ref, s2_ref, b2_ref,
                        out_ref, *, H, W):
    """One batch element: x_ref (1, C, H*W) -> out_ref (1, C, H*W)."""
    HW = H * W
    # Lane-aligned halo pad width: covers the max tap offset |dy*W + dx| <= W+1
    # (so row/h-boundary reads land in zeros) and is a multiple of 128 so the
    # concatenate below stays tile-aligned.
    PAD = ((W + 1 + 127) // 128) * 128

    x = x_ref[0]                                    # (Cin, HW)  f32, lane-dense

    # Column-validity masks: only the w (column) wrap needs masking; the h
    # (row) boundary is handled by the zero halo.  Computed once, reused by
    # both convs.
    col = jax.lax.broadcasted_iota(jnp.int32, (1, HW), 1) % W
    mask_l = col >= 1                                # tap dx = -1 is valid
    mask_r = col <= W - 2                            # tap dx = +1 is valid

    def im2col(a):
        """(C, HW) -> (9*C, HW) patches of a 3x3 / stride-1 / pad-1 conv."""
        c = a.shape[0]
        zeros = jnp.zeros((c, PAD), a.dtype)
        ap = jnp.concatenate([zeros, a, zeros], axis=1)   # (C, HW + 2*PAD)
        taps = []
        for dy in (-1, 0, 1):
            for dx in (-1, 0, 1):
                off = PAD + dy * W + dx                   # static offset
                t = ap[:, off:off + HW]                   # shifted slab
                if dx == -1:
                    t = jnp.where(mask_l, t, 0.0)
                elif dx == 1:
                    t = jnp.where(mask_r, t, 0.0)
                taps.append(t)
        return jnp.concatenate(taps, axis=0)              # (9*C, HW)

    # ---- conv1 (single im2col MXU matmul) -> bn1 -> relu ----
    y = jnp.dot(w1_ref[...], im2col(x), preferred_element_type=jnp.float32)
    y = jnp.maximum(y * s1_ref[...] + b1_ref[...], 0.0)   # (Cout, HW)

    # ---- conv2 -> bn2 -> +residual -> relu (residual = input slab) ----
    z = jnp.dot(w2_ref[...], im2col(y), preferred_element_type=jnp.float32)
    z = z * s2_ref[...] + b2_ref[...] + x                  # Cin == Cout
    out_ref[0] = jnp.maximum(z, 0.0).astype(out_ref.dtype)


def basic_block(x_nchw, w1, s1, b1, w2, s2, b2):
    """BasicBlock forward.

    x_nchw : (N, C, H, W) float32 (PyTorch layout)
    w1, w2 : (3, 3, Cin, Cout) HWIO conv weights
    s1, b1, s2, b2 : (C, 1) folded eval-mode BatchNorm scale / bias
    returns (N, C, H, W) float32
    """
    N, Cin, H, W = x_nchw.shape
    Cout = w1.shape[-1]
    HW = H * W

    # Metadata-only reshape (same HBM layout) -- no transpose / pad pass.
    x_flat = x_nchw.reshape(N, Cin, HW)

    # HWIO (ky, kx, ci, co) -> (co, (ky*3 + kx)*Cin + ci): matches im2col order.
    w1r = jnp.transpose(w1, (3, 0, 1, 2)).reshape(Cout, 9 * Cin)
    w2r = jnp.transpose(w2, (3, 0, 1, 2)).reshape(Cout, 9 * Cout)

    kernel = functools.partial(_basic_block_kernel, H=H, W=W)

    out_flat = pl.pallas_call(
        kernel,
        grid=(N,),
        in_specs=[
            pl.BlockSpec((1, Cin, HW), lambda n: (n, 0, 0)),
            pl.BlockSpec((Cout, 9 * Cin), lambda n: (0, 0)),
            pl.BlockSpec((Cout, 1), lambda n: (0, 0)),
            pl.BlockSpec((Cout, 1), lambda n: (0, 0)),
            pl.BlockSpec((Cout, 9 * Cout), lambda n: (0, 0)),
            pl.BlockSpec((Cout, 1), lambda n: (0, 0)),
            pl.BlockSpec((Cout, 1), lambda n: (0, 0)),
        ],
        out_specs=pl.BlockSpec((1, Cout, HW), lambda n: (n, 0, 0)),
        out_shape=jax.ShapeDtypeStruct((N, Cout, HW), jnp.float32),
        compiler_params=pltpu.CompilerParams(
            dimension_semantics=("parallel",)),
    )(x_flat, w1r, s1, b1, w2r, s2, b2)

    return out_flat.reshape(N, Cout, H, W)


def _reference(x_nchw, w1, g1, be1, m1, v1, w2, g2, be2, m2, v2, eps):
    """Pure-JAX reference (NHWC convs) for correctness check."""
    x = jnp.transpose(x_nchw, (0, 2, 3, 1))

    def conv(a, w):
        return jax.lax.conv_general_dilated(
            a, w, window_strides=(1, 1), padding="SAME",
            dimension_numbers=("NHWC", "HWIO", "NHWC"))

    def bn(a, g, b, m, v):
        return (a - m) / jnp.sqrt(v + eps) * g + b

    out = jnp.maximum(bn(conv(x, w1), g1, be1, m1, v1), 0.0)
    out = bn(conv(out, w2), g2, be2, m2, v2) + x
    out = jnp.maximum(out, 0.0)
    return jnp.transpose(out, (0, 3, 1, 2))


if __name__ == "__main__":
    key = jax.random.PRNGKey(0)
    N, C, H, W = 2, 8, 16, 16        # inplanes == planes, stride=1, no downsample
    eps = 1e-5

    ks = jax.random.split(key, 12)
    x = jax.random.normal(ks[0], (N, C, H, W), jnp.float32)

    # conv weights (HWIO), BatchNorm params (eval-mode running stats).
    w1 = jax.random.normal(ks[1], (3, 3, C, C), jnp.float32) * 0.1
    w2 = jax.random.normal(ks[2], (3, 3, C, C), jnp.float32) * 0.1
    g1 = 1.0 + 0.1 * jax.random.normal(ks[3], (C,), jnp.float32)
    be1 = 0.1 * jax.random.normal(ks[4], (C,), jnp.float32)
    m1 = 0.1 * jax.random.normal(ks[5], (C,), jnp.float32)
    v1 = 0.5 + jnp.abs(jax.random.normal(ks[6], (C,), jnp.float32))
    g2 = 1.0 + 0.1 * jax.random.normal(ks[7], (C,), jnp.float32)
    be2 = 0.1 * jax.random.normal(ks[8], (C,), jnp.float32)
    m2 = 0.1 * jax.random.normal(ks[9], (C,), jnp.float32)
    v2 = 0.5 + jnp.abs(jax.random.normal(ks[10], (C,), jnp.float32))

    # Fold eval-mode BN into per-channel scale/bias, shaped (C, 1) so they
    # broadcast along the lane (spatial) axis inside the kernel.
    s1 = (g1 / jnp.sqrt(v1 + eps)).reshape(C, 1)
    b1 = (be1 - m1 * g1 / jnp.sqrt(v1 + eps)).reshape(C, 1)
    s2 = (g2 / jnp.sqrt(v2 + eps)).reshape(C, 1)
    b2 = (be2 - m2 * g2 / jnp.sqrt(v2 + eps)).reshape(C, 1)

    out = basic_block(x, w1, s1, b1, w2, s2, b2)
    out = jax.block_until_ready(out)

    ref = _reference(x, w1, g1, be1, m1, v1, w2, g2, be2, m2, v2, eps)
    assert out.shape == (N, C, H, W)
    assert jnp.allclose(out, ref, rtol=1e-4, atol=1e-4), "mismatch vs JAX reference"

    print("KERNEL_OK")
</pallas_src>

<mosaic_0001>
module attributes {stable_mosaic.version = 11 : i64} {
  func.func @_basic_block_kernel(%arg0: i32, %arg1: memref<1x8x256xf32, #tpu.memory_space<vmem>>, %arg2: memref<8x72xf32, #tpu.memory_space<vmem>>, %arg3: memref<8x1xf32, #tpu.memory_space<vmem>>, %arg4: memref<8x1xf32, #tpu.memory_space<vmem>>, %arg5: memref<8x72xf32, #tpu.memory_space<vmem>>, %arg6: memref<8x1xf32, #tpu.memory_space<vmem>>, %arg7: memref<8x1xf32, #tpu.memory_space<vmem>>, %arg8: memref<1x8x256xf32, #tpu.memory_space<vmem>>) attributes {dimension_semantics = [#tpu.dimension_semantics<parallel>], iteration_bounds = array<i64: 2>, scalar_prefetch = 0 : i64, scratch_operands = 0 : i64, tpu.core_type = #tpu.core_type<tc>, window_params = [{transform_indices = @transform_0, window_bounds = array<i64: 1, 8, 256>}, {pipeline_mode = #tpu.pipeline_mode<synchronous>, transform_indices = @transform_1, window_bounds = array<i64: 8, 72>}, {pipeline_mode = #tpu.pipeline_mode<synchronous>, transform_indices = @transform_2, window_bounds = array<i64: 8, 1>}, {pipeline_mode = #tpu.pipeline_mode<synchronous>, transform_indices = @transform_3, window_bounds = array<i64: 8, 1>}, {pipeline_mode = #tpu.pipeline_mode<synchronous>, transform_indices = @transform_4, window_bounds = array<i64: 8, 72>}, {pipeline_mode = #tpu.pipeline_mode<synchronous>, transform_indices = @transform_5, window_bounds = array<i64: 8, 1>}, {pipeline_mode = #tpu.pipeline_mode<synchronous>, transform_indices = @transform_6, window_bounds = array<i64: 8, 1>}, {transform_indices = @transform_7, window_bounds = array<i64: 1, 8, 256>}]} {
    %c0 = arith.constant 0 : index
    %c0_0 = arith.constant 0 : index
    %c0_1 = arith.constant 0 : index
    %0 = vector.load %arg1[%c0, %c0_0, %c0_1] : memref<1x8x256xf32, #tpu.memory_space<vmem>>, vector<1x8x256xf32>
    %1 = vector.shape_cast %0 : vector<1x8x256xf32> to vector<8x256xf32>
    %2 = tpu.iota {dimensions = array<i32: 1>} : vector<1x256xi32>
    %c16_i32 = arith.constant 16 : i32
    %c0_i32 = arith.constant 0 : i32
    %3 = arith.cmpi eq, %c16_i32, %c0_i32 : i32
    %c1_i32 = arith.constant 1 : i32
    %4 = arith.select %3, %c1_i32, %c16_i32 : i32
    %5 = vector.broadcast %4 : i32 to vector<1x256xi32>
    %6 = arith.remsi %2, %5 : vector<1x256xi32>
    %c0_i32_2 = arith.constant 0 : i32
    %7 = vector.broadcast %c0_i32_2 : i32 to vector<1x256xi32>
    %8 = arith.cmpi ne, %6, %7 : vector<1x256xi32>
    %c0_i32_3 = arith.constant 0 : i32
    %9 = vector.broadcast %c0_i32_3 : i32 to vector<1x256xi32>
    %10 = arith.cmpi slt, %6, %9 : vector<1x256xi32>
    %c0_i32_4 = arith.constant 0 : i32
    %11 = arith.cmpi slt, %4, %c0_i32_4 : i32
    %12 = vector.broadcast %11 : i1 to vector<1x256xi1>
    %13 = vector.broadcast %12 : vector<1x256xi1> to vector<1x256xi1>
    %14 = arith.xori %10, %13 : vector<1x256xi1>
    %15 = arith.andi %14, %8 : vector<1x256xi1>
    %16 = vector.broadcast %4 : i32 to vector<1x256xi32>
    %17 = arith.addi %6, %16 : vector<1x256xi32>
    %18 = arith.select %15, %17, %6 : vector<1x256xi1>, vector<1x256xi32>
    %c1_i32_5 = arith.constant 1 : i32
    %19 = vector.broadcast %c1_i32_5 : i32 to vector<1x256xi32>
    %20 = arith.cmpi sge, %18, %19 : vector<1x256xi32>
    %c14_i32 = arith.constant 14 : i32
    %21 = vector.broadcast %c14_i32 : i32 to vector<1x256xi32>
    %22 = arith.cmpi sle, %18, %21 : vector<1x256xi32>
    %c0_6 = arith.constant 0 : index
    %c0_7 = arith.constant 0 : index
    %23 = vector.load %arg2[%c0_6, %c0_7] : memref<8x72xf32, #tpu.memory_space<vmem>>, vector<8x72xf32>
    %cst = arith.constant 0.000000e+00 : f32
    %24 = vector.broadcast %cst : f32 to vector<8x128xf32>
    %25 = tpu.concatenate %24, %1, %24 in 1 : vector<8x128xf32>, vector<8x256xf32>, vector<8x128xf32> -> vector<8x512xf32>
    %26 = vector.extract_strided_slice %25 {offsets = [0, 111], sizes = [8, 256], strides = [1, 1]} : vector<8x512xf32> to vector<8x256xf32>
    %cst_8 = arith.constant 0.000000e+00 : f32
    %27 = vector.shape_cast %20 : vector<1x256xi1> to vector<1x256xi1>
    %28 = vector.broadcast %27 : vector<1x256xi1> to vector<8x256xi1>
    %29 = vector.broadcast %cst_8 : f32 to vector<8x256xf32>
    %30 = arith.select %28, %26, %29 : vector<8x256xi1>, vector<8x256xf32>
    %31 = vector.extract_strided_slice %25 {offsets = [0, 112], sizes = [8, 256], strides = [1, 1]} : vector<8x512xf32> to vector<8x256xf32>
    %32 = vector.extract_strided_slice %25 {offsets = [0, 113], sizes = [8, 256], strides = [1, 1]} : vector<8x512xf32> to vector<8x256xf32>
    %cst_9 = arith.constant 0.000000e+00 : f32
    %33 = vector.shape_cast %22 : vector<1x256xi1> to vector<1x256xi1>
    %34 = vector.broadcast %33 : vector<1x256xi1> to vector<8x256xi1>
    %35 = vector.broadcast %cst_9 : f32 to vector<8x256xf32>
    %36 = arith.select %34, %32, %35 : vector<8x256xi1>, vector<8x256xf32>
    %37 = vector.extract_strided_slice %25 {offsets = [0, 127], sizes = [8, 256], strides = [1, 1]} : vector<8x512xf32> to vector<8x256xf32>
    %cst_10 = arith.constant 0.000000e+00 : f32
    %38 = vector.shape_cast %20 : vector<1x256xi1> to vector<1x256xi1>
    %39 = vector.broadcast %38 : vector<1x256xi1> to vector<8x256xi1>
    %40 = vector.broadcast %cst_10 : f32 to vector<8x256xf32>
    %41 = arith.select %39, %37, %40 : vector<8x256xi1>, vector<8x256xf32>
    %42 = vector.extract_strided_slice %25 {offsets = [0, 128], sizes = [8, 256], strides = [1, 1]} : vector<8x512xf32> to vector<8x256xf32>
    %43 = vector.extract_strided_slice %25 {offsets = [0, 129], sizes = [8, 256], strides = [1, 1]} : vector<8x512xf32> to vector<8x256xf32>
    %cst_11 = arith.constant 0.000000e+00 : f32
    %44 = vector.shape_cast %22 : vector<1x256xi1> to vector<1x256xi1>
    %45 = vector.broadcast %44 : vector<1x256xi1> to vector<8x256xi1>
    %46 = vector.broadcast %cst_11 : f32 to vector<8x256xf32>
    %47 = arith.select %45, %43, %46 : vector<8x256xi1>, vector<8x256xf32>
    %48 = vector.extract_strided_slice %25 {offsets = [0, 143], sizes = [8, 256], strides = [1, 1]} : vector<8x512xf32> to vector<8x256xf32>
    %cst_12 = arith.constant 0.000000e+00 : f32
    %49 = vector.shape_cast %20 : vector<1x256xi1> to vector<1x256xi1>
    %50 = vector.broadcast %49 : vector<1x256xi1> to vector<8x256xi1>
    %51 = vector.broadcast %cst_12 : f32 to vector<8x256xf32>
    %52 = arith.select %50, %48, %51 : vector<8x256xi1>, vector<8x256xf32>
    %53 = vector.extract_strided_slice %25 {offsets = [0, 144], sizes = [8, 256], strides = [1, 1]} : vector<8x512xf32> to vector<8x256xf32>
    %54 = vector.extract_strided_slice %25 {offsets = [0, 145], sizes = [8, 256], strides = [1, 1]} : vector<8x512xf32> to vector<8x256xf32>
    %cst_13 = arith.constant 0.000000e+00 : f32
    %55 = vector.shape_cast %22 : vector<1x256xi1> to vector<1x256xi1>
    %56 = vector.broadcast %55 : vector<1x256xi1> to vector<8x256xi1>
    %57 = vector.broadcast %cst_13 : f32 to vector<8x256xf32>
    %58 = arith.select %56, %54, %57 : vector<8x256xi1>, vector<8x256xf32>
    %59 = tpu.concatenate %30, %31, %36, %41, %42, %47, %52, %53, %58 in 0 : vector<8x256xf32>, vector<8x256xf32>, vector<8x256xf32>, vector<8x256xf32>, vector<8x256xf32>, vector<8x256xf32>, vector<8x256xf32>, vector<8x256xf32>, vector<8x256xf32> -> vector<72x256xf32>
    %cst_14 = arith.constant dense<0.000000e+00> : vector<8x256xf32>
    %60 = tpu.matmul %23, %59, %cst_14 {dimension_numbers = #tpu.dot_dimension_numbers<[1], [0], [0], [1], [0, 0, 1, 1], [], []>} : vector<8x72xf32>, vector<72x256xf32>, vector<8x256xf32> -> vector<8x256xf32>
    %c0_15 = arith.constant 0 : index
    %c0_16 = arith.constant 0 : index
    %61 = vector.load %arg3[%c0_15, %c0_16] : memref<8x1xf32, #tpu.memory_space<vmem>>, vector<8x1xf32>
    %62 = vector.broadcast %61 : vector<8x1xf32> to vector<8x256xf32>
    %63 = arith.mulf %60, %62 : vector<8x256xf32>
    %c0_17 = arith.constant 0 : index
    %c0_18 = arith.constant 0 : index
    %64 = vector.load %arg4[%c0_17, %c0_18] : memref<8x1xf32, #tpu.memory_space<vmem>>, vector<8x1xf32>
    %65 = vector.broadcast %64 : vector<8x1xf32> to vector<8x256xf32>
    %66 = arith.addf %63, %65 : vector<8x256xf32>
    %cst_19 = arith.constant 0.000000e+00 : f32
    %67 = vector.broadcast %cst_19 : f32 to vector<8x256xf32>
    %68 = arith.maximumf %66, %67 : vector<8x256xf32>
    %c0_20 = arith.constant 0 : index
    %c0_21 = arith.constant 0 : index
    %69 = vector.load %arg5[%c0_20, %c0_21] : memref<8x72xf32, #tpu.memory_space<vmem>>, vector<8x72xf32>
    %cst_22 = arith.constant 0.000000e+00 : f32
    %70 = vector.broadcast %cst_22 : f32 to vector<8x128xf32>
    %71 = tpu.concatenate %70, %68, %70 in 1 : vector<8x128xf32>, vector<8x256xf32>, vector<8x128xf32> -> vector<8x512xf32>
    %72 = vector.extract_strided_slice %71 {offsets = [0, 111], sizes = [8, 256], strides = [1, 1]} : vector<8x512xf32> to vector<8x256xf32>
    %cst_23 = arith.constant 0.000000e+00 : f32
    %73 = vector.shape_cast %20 : vector<1x256xi1> to vector<1x256xi1>
    %74 = vector.broadcast %73 : vector<1x256xi1> to vector<8x256xi1>
    %75 = vector.broadcast %cst_23 : f32 to vector<8x256xf32>
    %76 = arith.select %74, %72, %75 : vector<8x256xi1>, vector<8x256xf32>
    %77 = vector.extract_strided_slice %71 {offsets = [0, 112], sizes = [8, 256], strides = [1, 1]} : vector<8x512xf32> to vector<8x256xf32>
    %78 = vector.extract_strided_slice %71 {offsets = [0, 113], sizes = [8, 256], strides = [1, 1]} : vector<8x512xf32> to vector<8x256xf32>
    %cst_24 = arith.constant 0.000000e+00 : f32
    %79 = vector.shape_cast %22 : vector<1x256xi1> to vector<1x256xi1>
    %80 = vector.broadcast %79 : vector<1x256xi1> to vector<8x256xi1>
    %81 = vector.broadcast %cst_24 : f32 to vector<8x256xf32>
    %82 = arith.select %80, %78, %81 : vector<8x256xi1>, vector<8x256xf32>
    %83 = vector.extract_strided_slice %71 {offsets = [0, 127], sizes = [8, 256], strides = [1, 1]} : vector<8x512xf32> to vector<8x256xf32>
    %cst_25 = arith.constant 0.000000e+00 : f32
    %84 = vector.shape_cast %20 : vector<1x256xi1> to vector<1x256xi1>
    %85 = vector.broadcast %84 : vector<1x256xi1> to vector<8x256xi1>
    %86 = vector.broadcast %cst_25 : f32 to vector<8x256xf32>
    %87 = arith.select %85, %83, %86 : vector<8x256xi1>, vector<8x256xf32>
    %88 = vector.extract_strided_slice %71 {offsets = [0, 128], sizes = [8, 256], strides = [1, 1]} : vector<8x512xf32> to vector<8x256xf32>
    %89 = vector.extract_strided_slice %71 {offsets = [0, 129], sizes = [8, 256], strides = [1, 1]} : vector<8x512xf32> to vector<8x256xf32>
    %cst_26 = arith.constant 0.000000e+00 : f32
    %90 = vector.shape_cast %22 : vector<1x256xi1> to vector<1x256xi1>
    %91 = vector.broadcast %90 : vector<1x256xi1> to vector<8x256xi1>
    %92 = vector.broadcast %cst_26 : f32 to vector<8x256xf32>
    %93 = arith.select %91, %89, %92 : vector<8x256xi1>, vector<8x256xf32>
    %94 = vector.extract_strided_slice %71 {offsets = [0, 143], sizes = [8, 256], strides = [1, 1]} : vector<8x512xf32> to vector<8x256xf32>
    %cst_27 = arith.constant 0.000000e+00 : f32
    %95 = vector.shape_cast %20 : vector<1x256xi1> to vector<1x256xi1>
    %96 = vector.broadcast %95 : vector<1x256xi1> to vector<8x256xi1>
    %97 = vector.broadcast %cst_27 : f32 to vector<8x256xf32>
    %98 = arith.select %96, %94, %97 : vector<8x256xi1>, vector<8x256xf32>
    %99 = vector.extract_strided_slice %71 {offsets = [0, 144], sizes = [8, 256], strides = [1, 1]} : vector<8x512xf32> to vector<8x256xf32>
    %100 = vector.extract_strided_slice %71 {offsets = [0, 145], sizes = [8, 256], strides = [1, 1]} : vector<8x512xf32> to vector<8x256xf32>
    %cst_28 = arith.constant 0.000000e+00 : f32
    %101 = vector.shape_cast %22 : vector<1x256xi1> to vector<1x256xi1>
    %102 = vector.broadcast %101 : vector<1x256xi1> to vector<8x256xi1>
    %103 = vector.broadcast %cst_28 : f32 to vector<8x256xf32>
    %104 = arith.select %102, %100, %103 : vector<8x256xi1>, vector<8x256xf32>
    %105 = tpu.concatenate %76, %77, %82, %87, %88, %93, %98, %99, %104 in 0 : vector<8x256xf32>, vector<8x256xf32>, vector<8x256xf32>, vector<8x256xf32>, vector<8x256xf32>, vector<8x256xf32>, vector<8x256xf32>, vector<8x256xf32>, vector<8x256xf32> -> vector<72x256xf32>
    %cst_29 = arith.constant dense<0.000000e+00> : vector<8x256xf32>
    %106 = tpu.matmul %69, %105, %cst_29 {dimension_numbers = #tpu.dot_dimension_numbers<[1], [0], [0], [1], [0, 0, 1, 1], [], []>} : vector<8x72xf32>, vector<72x256xf32>, vector<8x256xf32> -> vector<8x256xf32>
    %c0_30 = arith.constant 0 : index
    %c0_31 = arith.constant 0 : index
    %107 = vector.load %arg6[%c0_30, %c0_31] : memref<8x1xf32, #tpu.memory_space<vmem>>, vector<8x1xf32>
    %108 = vector.broadcast %107 : vector<8x1xf32> to vector<8x256xf32>
    %109 = arith.mulf %106, %108 : vector<8x256xf32>
    %c0_32 = arith.constant 0 : index
    %c0_33 = arith.constant 0 : index
    %110 = vector.load %arg7[%c0_32, %c0_33] : memref<8x1xf32, #tpu.memory_space<vmem>>, vector<8x1xf32>
    %111 = vector.broadcast %110 : vector<8x1xf32> to vector<8x256xf32>
    %112 = arith.addf %109, %111 : vector<8x256xf32>
    %113 = arith.addf %112, %1 : vector<8x256xf32>
    %cst_34 = arith.constant 0.000000e+00 : f32
    %114 = vector.broadcast %cst_34 : f32 to vector<8x256xf32>
    %115 = arith.maximumf %113, %114 : vector<8x256xf32>
    %c0_35 = arith.constant 0 : index
    %c0_36 = arith.constant 0 : index
    %c0_37 = arith.constant 0 : index
    %116 = vector.load %arg8[%c0_35, %c0_36, %c0_37] : memref<1x8x256xf32, #tpu.memory_space<vmem>>, vector<1x8x256xf32>
    %117 = vector.shape_cast %116 : vector<1x8x256xf32> to vector<8x256xf32>
    %118 = vector.shape_cast %115 : vector<8x256xf32> to vector<1x8x256xf32>
    tpu.vector_store %arg8[%c0_35, %c0_36, %c0_37], %118 {strides = array<i32>} : memref<1x8x256xf32, #tpu.memory_space<vmem>>, vector<1x8x256xf32>,
    return
  }
  func.func @transform_0(%arg0: i32) -> (i32, i32, i32) {
    %c0_i32 = arith.constant 0 : i32
    %c0_i32_0 = arith.constant 0 : i32
    %c0_i32_1 = arith.constant 0 : i32
    return %arg0, %c0_i32, %c0_i32_0 : i32, i32, i32
  }
  func.func @transform_1(%arg0: i32) -> (i32, i32) {
    %c0_i32 = arith.constant 0 : i32
    %c0_i32_0 = arith.constant 0 : i32
    %c0_i32_1 = arith.constant 0 : i32
    return %c0_i32, %c0_i32_0 : i32, i32
  }
  func.func @transform_2(%arg0: i32) -> (i32, i32) {
    %c0_i32 = arith.constant 0 : i32
    %c0_i32_0 = arith.constant 0 : i32
    %c0_i32_1 = arith.constant 0 : i32
    return %c0_i32, %c0_i32_0 : i32, i32
  }
  func.func @transform_3(%arg0: i32) -> (i32, i32) {
    %c0_i32 = arith.constant 0 : i32
    %c0_i32_0 = arith.constant 0 : i32
    %c0_i32_1 = arith.constant 0 : i32
    return %c0_i32, %c0_i32_0 : i32, i32
  }
  func.func @transform_4(%arg0: i32) -> (i32, i32) {
    %c0_i32 = arith.constant 0 : i32
    %c0_i32_0 = arith.constant 0 : i32
    %c0_i32_1 = arith.constant 0 : i32
    return %c0_i32, %c0_i32_0 : i32, i32
  }
  func.func @transform_5(%arg0: i32) -> (i32, i32) {
    %c0_i32 = arith.constant 0 : i32
    %c0_i32_0 = arith.constant 0 : i32
    %c0_i32_1 = arith.constant 0 : i32
    return %c0_i32, %c0_i32_0 : i32, i32
  }
  func.func @transform_6(%arg0: i32) -> (i32, i32) {
    %c0_i32 = arith.constant 0 : i32
    %c0_i32_0 = arith.constant 0 : i32
    %c0_i32_1 = arith.constant 0 : i32
    return %c0_i32, %c0_i32_0 : i32, i32
  }
  func.func @transform_7(%arg0: i32) -> (i32, i32, i32) {
    %c0_i32 = arith.constant 0 : i32
    %c0_i32_0 = arith.constant 0 : i32
    %c0_i32_1 = arith.constant 0 : i32
    return %arg0, %c0_i32, %c0_i32_0 : i32, i32, i32
  }
}

</mosaic_0001>

<llo_original>
// kernel: tpu_custom_call.1
$region0: #{tpu_custom_call.1}
  #allocation0 [shape = 'u32[]', space=smem, size = 0x4, offset = 0x4, fixed_abs, tag = 'smem constant byte address 0x4 - core index']
  #allocation1 [shape = 'u32[144,128]{1,0:T(1,128)}', space=vmem, size = 0x12000, scoped, tag = 'internal scratch']
  %s0 = inlined_call_operand.vmem [shape: f32[2,8,256], index: 0, kind: input, shape index: {}]
  %s1 = inlined_call_operand.hbm [shape: f32[8,72], index: 1, kind: input, shape index: {}]
  %s2 = inlined_call_operand.vmem [shape: f32[8,1], index: 2, kind: input, shape index: {}]
  %s3 = inlined_call_operand.vmem [shape: f32[8,1], index: 3, kind: input, shape index: {}]
  %s4 = inlined_call_operand.vmem [shape: f32[8,72], index: 4, kind: input, shape index: {}]
  %s5 = inlined_call_operand.vmem [shape: f32[8,1], index: 5, kind: input, shape index: {}]
  %s6 = inlined_call_operand.vmem [shape: f32[8,1], index: 6, kind: input, shape index: {}]
  %s7 = inlined_call_operand.hbm [shape: f32[2,8,256], index: 7, kind: output, shape index: {}]
  %s8 = sld [smem:[#allocation0]]
  $region65: #{tpu_custom_call.1} parent=0
    _
  %s10 = ssub.s32 1, %s8
  %s11 = scalar_select 0, %s10, %s8
  $region1: #{tpu_custom_call.1} parent=0
    #allocation2 [shape = 'u8[4096]{0}', space=vmem, size = 0x1000, scoped, tag = 'input window, operand 1, single buffered']
    #allocation3 [shape = 's32[2]{0}', space=sflag, size = 0x8, scoped, tag = 'scoped memory for tpu_custom_call.1']
    #allocation4 [shape = 's32[2]{0}', space=sflag, size = 0x8, scoped, tag = 'scoped memory for tpu_custom_call.1']
    #allocation5 [shape = 'u8[16384]{0}', space=vmem, size = 0x4000, scoped, tag = 'output window, operand 0']
    %12 = vsyncpa [#allocation3], 0
    %13 = vsyncpa [#allocation4], 0
    %s14 = scalar_lea.sflag [#allocation4], 1
    %15 = vsyncpa %s14, 0
    loop: start=0, step=1, limit=4
    $region2: #{tpu_custom_call.1} parent=1 // loop_pre_header
      _
    $region3: #{tpu_custom_call.1} parent=1 // loop_header
      %s17 = sphi 0, %s21
      %p18 = scmp.ge.s32.totalorder %s17, 4
      %s27 = sphi 0, %s29
      %s30 = sphi 0, %s27
      %s31 = sphi 0, %s30
      %s47 = sphi 0, %s31
      %s51 = sphi 0, %s51
      %s53 = sphi 0, %s51
      %s54 = sphi 0, %s53
      %s68 = sphi 0, %s54
      %s72 = sphi 0, %s72
      %s74 = sphi 0, %s72
      %s75 = sphi 0, %s74
      %s89 = sphi 0, %s75
      %s93 = sphi 0, %s93
      %s95 = sphi 0, %s93
      %s96 = sphi 0, %s95
      %s110 = sphi 0, %s96
      %s114 = sphi 0, %s114
      %s116 = sphi 0, %s114
      %s117 = sphi 0, %s116
      %s131 = sphi 0, %s117
      %s135 = sphi 0, %s135
      %s137 = sphi 0, %s135
      %s138 = sphi 0, %s137
      %s152 = sphi 0, %s138
      %s156 = sphi 0, %s156
      %s158 = sphi 0, %s156
      %s159 = sphi 0, %s158
      %s173 = sphi 0, %s159
      %s179 = sphi 0, %s181
      %s182 = sphi 0, %s179
      %s183 = sphi 0, %s182
      %s199 = sphi 0, %s183
    $region4: #{tpu_custom_call.1} parent=1 // loop_header_branch
      %20 = sbr.rel (%p18) target = $region8
    $region5: #{tpu_custom_call.1} parent=1 // loop_body
      %s22 = ssub.s32 %s17, 1
      %s23 = ssub.s32 %s17, 2
      %s24 = sadd.s32 %s17, 1
      %s25 = ssub.s32 %s17, %s24
      %p26 = scmp.eq.s32.totalorder %s25, 0
      %s28 = sadd.s32 %s27, 1
      %s29 = scalar_select %p26, %s27, %s28
      %p32 = pneg %p26
      %p33 = scmp.eq.s32.totalorder %s17, 1
      %p34 = por %p32, %p33
      %p35 = scmp.ne.s32.totalorder %s27, %s30
      %p36 = scmp.eq.s32.totalorder %s17, 0
      %p37 = por %p35, %p36
      %p38 = scmp.ne.s32.totalorder %s27, %s30
      %p39 = scmp.eq.s32.totalorder %s22, 1
      %p40 = por %p38, %p39
      %p41 = scmp.ne.s32.totalorder %s30, %s31
      %p42 = scmp.eq.s32.totalorder %s22, 0
      %p43 = por %p41, %p42
      %p44 = scmp.ne.s32.totalorder %s30, %s31
      %p45 = scmp.eq.s32.totalorder %s23, 1
      %p46 = por %p44, %p45
      %p48 = scmp.ne.s32.totalorder %s31, %s47
      %p49 = scmp.eq.s32.totalorder %s23, 0
      %p50 = por %p48, %p49
      %s52 = sadd.s32 %s51, 1
      %p55 = scmp.eq.s32.totalorder %s17, 1
      %p56 = scmp.ne.s32.totalorder %s51, %s53
      %p57 = scmp.eq.s32.totalorder %s17, 0
      %p58 = por %p56, %p57
      %p59 = scmp.ne.s32.totalorder %s51, %s53
      %p60 = scmp.eq.s32.totalorder %s22, 1
      %p61 = por %p59, %p60
      %p62 = scmp.ne.s32.totalorder %s53, %s54
      %p63 = scmp.eq.s32.totalorder %s22, 0
      %p64 = por %p62, %p63
      %p65 = scmp.ne.s32.totalorder %s53, %s54
      %p66 = scmp.eq.s32.totalorder %s23, 1
      %p67 = por %p65, %p66
      %p69 = scmp.ne.s32.totalorder %s54, %s68
      %p70 = scmp.eq.s32.totalorder %s23, 0
      %p71 = por %p69, %p70
      %s73 = sadd.s32 %s72, 1
      %p76 = scmp.eq.s32.totalorder %s17, 1
      %p77 = scmp.ne.s32.totalorder %s72, %s74
      %p78 = scmp.eq.s32.totalorder %s17, 0
      %p79 = por %p77, %p78
      %p80 = scmp.ne.s32.totalorder %s72, %s74
      %p81 = scmp.eq.s32.totalorder %s22, 1
      %p82 = por %p80, %p81
      %p83 = scmp.ne.s32.totalorder %s74, %s75
      %p84 = scmp.eq.s32.totalorder %s22, 0
      %p85 = por %p83, %p84
      %p86 = scmp.ne.s32.totalorder %s74, %s75
      %p87 = scmp.eq.s32.totalorder %s23, 1
      %p88 = por %p86, %p87
      %p90 = scmp.ne.s32.totalorder %s75, %s89
      %p91 = scmp.eq.s32.totalorder %s23, 0
      %p92 = por %p90, %p91
      %s94 = sadd.s32 %s93, 1
      %p97 = scmp.eq.s32.totalorder %s17, 1
      %p98 = scmp.ne.s32.totalorder %s93, %s95
      %p99 = scmp.eq.s32.totalorder %s17, 0
      %p100 = por %p98, %p99
      %p101 = scmp.ne.s32.totalorder %s93, %s95
      %p102 = scmp.eq.s32.totalorder %s22, 1
      %p103 = por %p101, %p102
      %p104 = scmp.ne.s32.totalorder %s95, %s96
      %p105 = scmp.eq.s32.totalorder %s22, 0
      %p106 = por %p104, %p105
      %p107 = scmp.ne.s32.totalorder %s95, %s96
      %p108 = scmp.eq.s32.totalorder %s23, 1
      %p109 = por %p107, %p108
      %p111 = scmp.ne.s32.totalorder %s96, %s110
      %p112 = scmp.eq.s32.totalorder %s23, 0
      %p113 = por %p111, %p112
      %s115 = sadd.s32 %s114, 1
      %p118 = scmp.eq.s32.totalorder %s17, 1
      %p119 = scmp.ne.s32.totalorder %s114, %s116
      %p120 = scmp.eq.s32.totalorder %s17, 0
      %p121 = por %p119, %p120
      %p122 = scmp.ne.s32.totalorder %s114, %s116
      %p123 = scmp.eq.s32.totalorder %s22, 1
      %p124 = por %p122, %p123
      %p125 = scmp.ne.s32.totalorder %s116, %s117
      %p126 = scmp.eq.s32.totalorder %s22, 0
      %p127 = por %p125, %p126
      %p128 = scmp.ne.s32.totalorder %s116, %s117
      %p129 = scmp.eq.s32.totalorder %s23, 1
      %p130 = por %p128, %p129
      %p132 = scmp.ne.s32.totalorder %s117, %s131
      %p133 = scmp.eq.s32.totalorder %s23, 0
      %p134 = por %p132, %p133
      %s136 = sadd.s32 %s135, 1
      %p139 = scmp.eq.s32.totalorder %s17, 1
      %p140 = scmp.ne.s32.totalorder %s135, %s137
      %p141 = scmp.eq.s32.totalorder %s17, 0
      %p142 = por %p140, %p141
      %p143 = scmp.ne.s32.totalorder %s135, %s137
      %p144 = scmp.eq.s32.totalorder %s22, 1
      %p145 = por %p143, %p144
      %p146 = scmp.ne.s32.totalorder %s137, %s138
      %p147 = scmp.eq.s32.totalorder %s22, 0
      %p148 = por %p146, %p147
      %p149 = scmp.ne.s32.totalorder %s137, %s138
      %p150 = scmp.eq.s32.totalorder %s23, 1
      %p151 = por %p149, %p150
      %p153 = scmp.ne.s32.totalorder %s138, %s152
      %p154 = scmp.eq.s32.totalorder %s23, 0
      %p155 = por %p153, %p154
      %s157 = sadd.s32 %s156, 1
      %p160 = scmp.eq.s32.totalorder %s17, 1
      %p161 = scmp.ne.s32.totalorder %s156, %s158
      %p162 = scmp.eq.s32.totalorder %s17, 0
      %p163 = por %p161, %p162
      %p164 = scmp.ne.s32.totalorder %s156, %s158
      %p165 = scmp.eq.s32.totalorder %s22, 1
      %p166 = por %p164, %p165
      %p167 = scmp.ne.s32.totalorder %s158, %s159
      %p168 = scmp.eq.s32.totalorder %s22, 0
      %p169 = por %p167, %p168
      %p170 = scmp.ne.s32.totalorder %s158, %s159
      %p171 = scmp.eq.s32.totalorder %s23, 1
      %p172 = por %p170, %p171
      %p174 = scmp.ne.s32.totalorder %s159, %s173
      %p175 = scmp.eq.s32.totalorder %s23, 0
      %p176 = por %p174, %p175
      %s177 = ssub.s32 %s17, %s24
      %p178 = scmp.eq.s32.totalorder %s177, 0
      %s180 = sadd.s32 %s179, 1
      %s181 = scalar_select %p178, %s179, %s180
      %p184 = pneg %p178
      %p185 = scmp.eq.s32.totalorder %s17, 1
      %p186 = por %p184, %p185
      %p187 = scmp.ne.s32.totalorder %s179, %s182
      %p188 = scmp.eq.s32.totalorder %s17, 0
      %p189 = por %p187, %p188
      %p190 = scmp.ne.s32.totalorder %s179, %s182
      %p191 = scmp.eq.s32.totalorder %s22, 1
      %p192 = por %p190, %p191
      %p193 = scmp.ne.s32.totalorder %s182, %s183
      %p194 = scmp.eq.s32.totalorder %s22, 0
      %p195 = por %p193, %p194
      %p196 = scmp.ne.s32.totalorder %s182, %s183
      %p197 = scmp.eq.s32.totalorder %s23, 1
      %p198 = por %p196, %p197
      %p200 = scmp.ne.s32.totalorder %s183, %s199
      %p201 = scmp.eq.s32.totalorder %s23, 0
      %p202 = por %p200, %p201
      %p203 = scmp.le.s32.totalorder 1, %s17
      %p204 = scmp.lt.s32.totalorder %s17, 3
      %p205 = pnand %p203, %p204
      %p206 = pneg %p205
      // Predicated region
      $region9: #{tpu_custom_call.1} parent=5 // pred_check
        _
      $region10: #{tpu_custom_call.1} parent=5 // pred_check_branch
        %208 = sbr.rel (%p205) target = $region12
      $region11: #{tpu_custom_call.1} parent=5 // pred_region
        %s209 = ssub.s32 %s17, 1
        // Predicated region
        $region13: #{tpu_custom_call.1} parent=11 // pred_check
          %p210 = pneg %p64
        $region14: #{tpu_custom_call.1} parent=11 // pred_check_branch
          %212 = sbr.rel (%p210) target = $region16
        $region15: #{tpu_custom_call.1} parent=11 // pred_region
          %s214 = ssub.s32 128, 128
          %215 = vsyncadd [#allocation3], %s214
          %s217 = sshll.u32 [#allocation2], 4
          %s218 = int_to_ptr.vmem [resolvable:$true] %s217
          %220 = dma.hbm_to_vmem [thread:$0]  %s1, 128, %s218, [#allocation3]
        $region16: #{tpu_custom_call.1} parent=11 // pred_fallthru
          _
        // Predicated region
        $region17: #{tpu_custom_call.1} parent=11 // pred_check
          %p221 = pneg %p85
        $region18: #{tpu_custom_call.1} parent=11 // pred_check_branch
          %223 = sbr.rel (%p221) target = $region20
        $region19: #{tpu_custom_call.1} parent=11 // pred_region
          _
        $region20: #{tpu_custom_call.1} parent=11 // pred_fallthru
          _
        // Predicated region
        $region21: #{tpu_custom_call.1} parent=11 // pred_check
          %p224 = pneg %p106
        $region22: #{tpu_custom_call.1} parent=11 // pred_check_branch
          %226 = sbr.rel (%p224) target = $region24
        $region23: #{tpu_custom_call.1} parent=11 // pred_region
          _
        $region24: #{tpu_custom_call.1} parent=11 // pred_fallthru
          _
        // Predicated region
        $region25: #{tpu_custom_call.1} parent=11 // pred_check
          %p227 = pneg %p127
        $region26: #{tpu_custom_call.1} parent=11 // pred_check_branch
          %229 = sbr.rel (%p227) target = $region28
        $region27: #{tpu_custom_call.1} parent=11 // pred_region
          _
        $region28: #{tpu_custom_call.1} parent=11 // pred_fallthru
          _
        // Predicated region
        $region29: #{tpu_custom_call.1} parent=11 // pred_check
          %p230 = pneg %p148
        $region30: #{tpu_custom_call.1} parent=11 // pred_check_branch
          %232 = sbr.rel (%p230) target = $region32
        $region31: #{tpu_custom_call.1} parent=11 // pred_region
          _
        $region32: #{tpu_custom_call.1} parent=11 // pred_fallthru
          _
        // Predicated region
        $region33: #{tpu_custom_call.1} parent=11 // pred_check
          %p233 = pneg %p169
        $region34: #{tpu_custom_call.1} parent=11 // pred_check_branch
          %235 = sbr.rel (%p233) target = $region36
        $region35: #{tpu_custom_call.1} parent=11 // pred_region
          _
        $region36: #{tpu_custom_call.1} parent=11 // pred_fallthru
          _
      $region12: #{tpu_custom_call.1} parent=5 // pred_fallthru
        _
      %p236 = scmp.lt.s32.totalorder %s17, 2
      // Predicated region
      $region37: #{tpu_custom_call.1} parent=5 // pred_check
        %p237 = pneg %p236
      $region38: #{tpu_custom_call.1} parent=5 // pred_check_branch
        %239 = sbr.rel (%p237) target = $region40
      $region39: #{tpu_custom_call.1} parent=5 // pred_region
        // Predicated region
        $region41: #{tpu_custom_call.1} parent=39 // pred_check
          %p240 = pneg %p37
        $region42: #{tpu_custom_call.1} parent=39 // pred_check_branch
          %242 = sbr.rel (%p240) target = $region44
        $region43: #{tpu_custom_call.1} parent=39 // pred_region
          %p243 = scmp.lt.s32.totalorder %s17, 1
          %s244 = scalar_select %p243, %s17, 1
          %s245 = smul.addr %s244, 2
          %s246 = smul.addr %s245, 8
          %s247 = scalar_lea.vmem %s0, %s246
        $region44: #{tpu_custom_call.1} parent=39 // pred_fallthru
          _
      $region40: #{tpu_custom_call.1} parent=5 // pred_fallthru
        _
      %p248 = scmp.le.s32.totalorder 1, %s17
      %p249 = scmp.lt.s32.totalorder %s17, 3
      %p250 = pnand %p248, %p249
      %p251 = pneg %p250
      // Predicated region
      $region45: #{tpu_custom_call.1} parent=5 // pred_check
        _
      $region46: #{tpu_custom_call.1} parent=5 // pred_check_branch
        %253 = sbr.rel (%p250) target = $region48
      $region47: #{tpu_custom_call.1} parent=5 // pred_region
        %s254 = ssub.s32 %s17, 1
        // Predicated region
        $region49: #{tpu_custom_call.1} parent=47 // pred_check
          %p255 = pneg %p64
        $region50: #{tpu_custom_call.1} parent=47 // pred_check_branch
          %257 = sbr.rel (%p255) target = $region52
        $region51: #{tpu_custom_call.1} parent=47 // pred_region
          %258 = dma.done [#allocation3], 128
        $region52: #{tpu_custom_call.1} parent=47 // pred_fallthru
          _
        %p259 = scmp.lt.s32.totalorder %s22, 1
        %s260 = scalar_select %p259, %s22, 1
        %s261 = smul.addr %s260, 2
        %s262 = smul.addr %s261, 8
        %s263 = scalar_lea.vmem %s0, %s262
        %p264 = pneg %p43
        %p265 = pneg %p40
        %p266 = pneg %p64
        %p267 = pneg %p61
        %p268 = pneg %p85
        %p269 = pneg %p82
        %p270 = pneg %p106
        %p271 = pneg %p103
        %p272 = pneg %p127
        %p273 = pneg %p124
        %p274 = pneg %p148
        %p275 = pneg %p145
        %p276 = pneg %p169
        %p277 = pneg %p166
        %p278 = pneg %p195
        %p279 = pneg %p192
        %s280 = sand.u32 %s182, 1
        %s281 = scalar_lea.sflag [#allocation4], %s280
        %s282 = sand.u32 %s182, 1
        %s283 = smul.addr %s282, 16
        %s284 = scalar_lea.vmem [#allocation5], %s283
        %p285 = scmp.lt.s32.totalorder %s22, 1
        %s286 = scalar_select %p285, %s22, 1
        %s287 = smul.addr %s286, 2
        %s288 = smul.addr %s287, 8
        %s289 = scalar_lea.vmem %s0, %s288
        %v290 = vld [vmem:[%s289] sm:$0xff]
        %v291 = vld [vmem:[%s289 + $0x8] sm:$0xff]
        %v292 = vlaneseq
        %v293 = vand.u32 %v292, 127
        %v294 = vadd.s32 %v293, 128
        %vm295 = vcmp.lt.s32.totalorder %v293, 0
        %v296 = vsub.s32 0, %v293
        %v297 = vsel %vm295, %v296, %v293
        %v298 = vshrl.u32 %v297, 4
        %v299 = vand.u32 %v297, 15
        %v300 = vsub.s32 0, %v299
        %v301 = vsel %vm295, %v300, %v299
        %vm302 = vcmp.lt.s32.totalorder %v294, 0
        %v303 = vsub.s32 0, %v294
        %v304 = vsel %vm302, %v303, %v294
        %v305 = vshrl.u32 %v304, 4
        %v306 = vand.u32 %v304, 15
        %v307 = vsub.s32 0, %v306
        %v308 = vsel %vm302, %v307, %v306
        %vm309 = vcmp.ne.s32.totalorder %v301, 0
        %vm310 = vcmp.ne.s32.totalorder %v308, 0
        %vm311 = vcmp.lt.s32.totalorder %v301, 0
        %vm312 = vcmp.lt.s32.totalorder %v308, 0
        %vm313 = vmand %vm311, %vm309
        %vm314 = vmand %vm312, %vm310
        %v315 = vadd.s32 %v301, 16
        %v316 = vadd.s32 %v308, 16
        %v317 = vsel %vm313, %v315, %v301
        %v318 = vsel %vm314, %v316, %v308
        %vm319 = vcmp.ge.s32.totalorder %v317, 1
        %vm320 = vcmp.ge.s32.totalorder %v318, 1
        %vm321 = vcmp.le.s32.totalorder %v317, 14
        %vm322 = vcmp.le.s32.totalorder %v318, 14
        %v323 = vld [vmem:[#allocation2] sm:$0xff]
        %v324 = vsel %vm319, 1, 0
        %v325 = vsel %vm320, 1, 0
        %vm326 = vcmp.eq.s32.totalorder %v324, 1
        %vm327 = vcmp.eq.s32.totalorder %v325, 1
        %331 = vrot.lane.b32.xlu0 0.0, 17
        %v332 = vpop.permute.xlu0 %331
        %333 = vrot.lane.b32.xlu0 %v290, 17
        %v334 = vpop.permute.xlu0 %333
        %335 = vrot.lane.b32.xlu0 %v291, 17
        %v336 = vpop.permute.xlu0 %335
        %vm337 = vcmask 138240
        %v338 = vsel %vm337, %v332, %v334
        %v339 = vsel %vm337, %v334, %v336
        %v342 = vsel %vm326, %v338, 0.0
        %v343 = vsel %vm327, %v339, 0.0
        %v344 = vsel %vm321, 1, 0
        %v345 = vsel %vm322, 1, 0
        %vm346 = vcmp.eq.s32.totalorder %v344, 1
        %vm347 = vcmp.eq.s32.totalorder %v345, 1
        %348 = vrot.lane.b32.xlu0 0.0, 15
        %v349 = vpop.permute.xlu0 %348
        %350 = vrot.lane.b32.xlu0 %v290, 15
        %v351 = vpop.permute.xlu0 %350
        %352 = vrot.lane.b32.xlu0 %v291, 15
        %v353 = vpop.permute.xlu0 %352
        %vm354 = vcmask 121856
        %v355 = vsel %vm354, %v349, %v351
        %v356 = vsel %vm354, %v351, %v353
        %v359 = vsel %vm346, %v355, 0.0
        %v360 = vsel %vm347, %v356, 0.0
        %361 = vrot.lane.b32.xlu0 0.0, 1
        %v362 = vpop.permute.xlu0 %361
        %363 = vrot.lane.b32.xlu0 %v290, 1
        %v364 = vpop.permute.xlu0 %363
        %365 = vrot.lane.b32.xlu0 %v291, 1
        %v366 = vpop.permute.xlu0 %365
        %vm367 = vcmask 7168
        %v368 = vsel %vm367, %v362, %v364
        %v369 = vsel %vm367, %v364, %v366
        %v372 = vsel %vm326, %v368, 0.0
        %v373 = vsel %vm327, %v369, 0.0
        %374 = vrot.lane.b32.xlu0 %v290, 127
        %v375 = vpop.permute.xlu0 %374
        %376 = vrot.lane.b32.xlu0 %v291, 127
        %v377 = vpop.permute.xlu0 %376
        %378 = vrot.lane.b32.xlu0 0.0, 127
        %v379 = vpop.permute.xlu0 %378
        %vm380 = vcmask 1039360
        %v381 = vsel %vm380, %v375, %v377
        %v382 = vsel %vm380, %v377, %v379
        %v385 = vsel %vm346, %v381, 0.0
        %v386 = vsel %vm347, %v382, 0.0
        %387 = vrot.lane.b32.xlu0 %v290, 113
        %v388 = vpop.permute.xlu0 %387
        %389 = vrot.lane.b32.xlu0 %v291, 113
        %v390 = vpop.permute.xlu0 %389
        %391 = vrot.lane.b32.xlu0 0.0, 113
        %v392 = vpop.permute.xlu0 %391
        %vm393 = vcmask 924672
        %v394 = vsel %vm393, %v388, %v390
        %v395 = vsel %vm393, %v390, %v392
        %v398 = vsel %vm326, %v394, 0.0
        %v399 = vsel %vm327, %v395, 0.0
        %400 = vrot.lane.b32.xlu0 %v290, 111
        %v401 = vpop.permute.xlu0 %400
        %402 = vrot.lane.b32.xlu0 %v291, 111
        %v403 = vpop.permute.xlu0 %402
        %404 = vrot.lane.b32.xlu0 0.0, 111
        %v405 = vpop.permute.xlu0 %404
        %vm406 = vcmask 908288
        %v407 = vsel %vm406, %v401, %v403
        %v408 = vsel %vm406, %v403, %v405
        %v411 = vsel %vm346, %v407, 0.0
        %v412 = vsel %vm347, %v408, 0.0
        %413 = vrot.lane.b32.xlu0 0.0, 16
        %v414 = vpop.permute.xlu0 %413
        %415 = vrot.lane.b32.xlu0 %v290, 16
        %v416 = vpop.permute.xlu0 %415
        %417 = vrot.lane.b32.xlu0 %v291, 16
        %v418 = vpop.permute.xlu0 %417
        %vm419 = vcmask 130048
        %v420 = vsel %vm419, %v414, %v416
        %v421 = vsel %vm419, %v416, %v418
        %424 = vrot.lane.b32.xlu0 %v290, 112
        %v425 = vpop.permute.xlu0 %424
        %426 = vrot.lane.b32.xlu0 %v291, 112
        %v427 = vpop.permute.xlu0 %426
        %428 = vrot.lane.b32.xlu0 0.0, 112
        %v429 = vpop.permute.xlu0 %428
        %vm430 = vcmask 916480
        %v431 = vsel %vm430, %v425, %v427
        %v432 = vsel %vm430, %v427, %v429
        %vm435 = vcmask 588800
        %v437 = vsel %vm435, %v323, 0
        %439 = vmatprep.subr.mxu0 0.0
        %440 = vmatpush1.msra.mxu0 0.0
        %441 = vmatprep.subr.mxu0 0.0
        %442 = vmatpush1.msra.mxu0 0.0
        %443 = vmatprep.subr.mxu0 0.0
        %444 = vmatpush1.msra.mxu0 0.0
        %445 = vmatprep.subr.mxu0 0.0
        %446 = vmatpush1.msra.mxu0 0.0
        %447 = vmatprep.subr.mxu0 0.0
        %448 = vmatpush1.msra.mxu0 0.0
        %449 = vmatprep.subr.mxu0 0.0
        %450 = vmatpush1.msra.mxu0 0.0
        %451 = vmatprep.subr.mxu0 0.0
        %452 = vmatpush1.msra.mxu0 0.0
        %453 = vmatprep.subr.mxu0 %v412
        %454 = vmatpush1.msra.mxu0 %v411
        %455 = vmatprep.subr.mxu0 %v432
        %456 = vmatpush1.msra.mxu0 %v431
        %457 = vmatprep.subr.mxu0 %v399
        %458 = vmatpush1.msra.mxu0 %v398
        %459 = vmatprep.subr.mxu0 %v386
        %460 = vmatpush1.msra.mxu0 %v385
        %461 = vmatprep.subr.mxu0 %v291
        %462 = vmatpush1.msra.mxu0 %v290
        %463 = vmatprep.subr.mxu0 %v373
        %464 = vmatpush1.msra.mxu0 %v372
        %465 = vmatprep.subr.mxu0 %v360
        %466 = vmatpush1.msra.mxu0 %v359
        %467 = vmatprep.subr.mxu0 %v421
        %468 = vmatpush1.msra.mxu0 %v420
        %469 = vmatprep.subr.mxu0 %v343
        %470 = vmatpush1.msra.mxu0 %v342
        %471 = vmatprep.subr.mxu0 0.0
        %472 = vmatpush2.msra.mxu0 0.0
        %473 = vmatprep.subr.mxu0 0.0
        %474 = vmatpush2.msra.mxu0 0.0
        %475 = vmatprep.subr.mxu0 0.0
        %476 = vmatpush2.msra.mxu0 0.0
        %477 = vmatprep.subr.mxu0 0.0
        %478 = vmatpush2.msra.mxu0 0.0
        %479 = vmatprep.subr.mxu0 0.0
        %480 = vmatpush2.msra.mxu0 0.0
        %481 = vmatprep.subr.mxu0 0.0
        %482 = vmatpush2.msra.mxu0 0.0
        %483 = vmatprep.subr.mxu0 0.0
        %484 = vmatpush2.msra.mxu0 0.0
        %485 = vmatprep.subr.mxu0 0.0
        %486 = vmatpush2.msra.mxu0 0.0
        %487 = vmatprep.subr.mxu0 0.0
        %488 = vmatpush2.msra.mxu0 0.0
        %489 = vmatprep.subr.mxu0 0.0
        %490 = vmatpush2.msra.mxu0 0.0
        %491 = vmatprep.subr.mxu0 0.0
        %492 = vmatpush2.msra.mxu0 0.0
        %493 = vmatprep.subr.mxu0 0.0
        %494 = vmatpush2.msra.mxu0 0.0
        %495 = vmatprep.subr.mxu0 0.0
        %496 = vmatpush2.msra.mxu0 0.0
        %497 = vmatprep.subr.mxu0 0.0
        %498 = vmatpush2.msra.mxu0 0.0
        %499 = vmatprep.subr.mxu0 0.0
        %500 = vmatpush2.msra.mxu0 0.0
        %501 = vmatprep.subr.mxu0 0.0
        %502 = vmatpush2.msra.mxu0 0.0
        %503 = vmatprep.mubr.f32.mxu0 0.0
        %504 = vmatmul.mubr.f32.gmra.mxu0 %v437
        %v505 = vpop.f32.mrf.mxu0
        %v506 = vadd.f32 0.0, %v505
        %v507 = vpop.f32.mrf.mxu0
        %v508 = vadd.f32 0.0, %v507
        %509 = vdwg.mxu0
        %v510 = vld [vmem:[%s2] sm:$0xff]
        %512 = vset.pattern.permute.xlu0 0
        %513 = vperm.xlu0 %512, %v510
        %v514 = vpop.permute.xlu0 %513
        %v516 = vmul.f32 %v506, %v514
        %v517 = vmul.f32 %v508, %v514
        %v518 = vld [vmem:[%s3] sm:$0xff]
        %520 = vset.pattern.permute.xlu0 0
        %521 = vperm.xlu0 %520, %v518
        %v522 = vpop.permute.xlu0 %521
        %v524 = vadd.f32 %v516, %v522
        %v525 = vadd.f32 %v517, %v522
        %v526 = vmax.f32 %v524, 0.0
        %v527 = vmax.f32 %v525, 0.0
        %v528 = vld [vmem:[%s4] sm:$0xff]
        %531 = vrot.lane.b32.xlu0 %v526, 17
        %v532 = vpop.permute.xlu0 %531
        %533 = vrot.lane.b32.xlu0 %v527, 17
        %v534 = vpop.permute.xlu0 %533
        %v535 = vsel %vm337, %v332, %v532
        %v536 = vsel %vm337, %v532, %v534
        %v539 = vsel %vm326, %v535, 0.0
        %v540 = vsel %vm327, %v536, 0.0
        %541 = vrot.lane.b32.xlu0 %v526, 15
        %v542 = vpop.permute.xlu0 %541
        %543 = vrot.lane.b32.xlu0 %v527, 15
        %v544 = vpop.permute.xlu0 %543
        %v545 = vsel %vm354, %v349, %v542
        %v546 = vsel %vm354, %v542, %v544
        %v549 = vsel %vm346, %v545, 0.0
        %v550 = vsel %vm347, %v546, 0.0
        %551 = vrot.lane.b32.xlu0 %v526, 1
        %v552 = vpop.permute.xlu0 %551
        %553 = vrot.lane.b32.xlu0 %v527, 1
        %v554 = vpop.permute.xlu0 %553
        %v555 = vsel %vm367, %v362, %v552
        %v556 = vsel %vm367, %v552, %v554
        %v559 = vsel %vm326, %v555, 0.0
        %v560 = vsel %vm327, %v556, 0.0
        %561 = vrot.lane.b32.xlu0 %v526, 127
        %v562 = vpop.permute.xlu0 %561
        %563 = vrot.lane.b32.xlu0 %v527, 127
        %v564 = vpop.permute.xlu0 %563
        %v565 = vsel %vm380, %v562, %v564
        %v566 = vsel %vm380, %v564, %v379
        %v569 = vsel %vm346, %v565, 0.0
        %v570 = vsel %vm347, %v566, 0.0
        %571 = vrot.lane.b32.xlu0 %v526, 113
        %v572 = vpop.permute.xlu0 %571
        %573 = vrot.lane.b32.xlu0 %v527, 113
        %v574 = vpop.permute.xlu0 %573
        %v575 = vsel %vm393, %v572, %v574
        %v576 = vsel %vm393, %v574, %v392
        %v579 = vsel %vm326, %v575, 0.0
        %v580 = vsel %vm327, %v576, 0.0
        %581 = vrot.lane.b32.xlu0 %v526, 111
        %v582 = vpop.permute.xlu0 %581
        %583 = vrot.lane.b32.xlu0 %v527, 111
        %v584 = vpop.permute.xlu0 %583
        %v585 = vsel %vm406, %v582, %v584
        %v586 = vsel %vm406, %v584, %v405
        %v589 = vsel %vm346, %v585, 0.0
        %v590 = vsel %vm347, %v586, 0.0
        %591 = vrot.lane.b32.xlu0 %v526, 16
        %v592 = vpop.permute.xlu0 %591
        %593 = vrot.lane.b32.xlu0 %v527, 16
        %v594 = vpop.permute.xlu0 %593
        %v595 = vsel %vm419, %v414, %v592
        %v596 = vsel %vm419, %v592, %v594
        %599 = vrot.lane.b32.xlu0 %v526, 112
        %v600 = vpop.permute.xlu0 %599
        %601 = vrot.lane.b32.xlu0 %v527, 112
        %v602 = vpop.permute.xlu0 %601
        %v603 = vsel %vm430, %v600, %v602
        %v604 = vsel %vm430, %v602, %v429
        %v608 = vsel %vm435, %v528, 0
        %610 = vmatprep.subr.mxu0 0.0
        %611 = vmatpush1.msra.mxu0 0.0
        %612 = vmatprep.subr.mxu0 0.0
        %613 = vmatpush1.msra.mxu0 0.0
        %614 = vmatprep.subr.mxu0 0.0
        %615 = vmatpush1.msra.mxu0 0.0
        %616 = vmatprep.subr.mxu0 0.0
        %617 = vmatpush1.msra.mxu0 0.0
        %618 = vmatprep.subr.mxu0 0.0
        %619 = vmatpush1.msra.mxu0 0.0
        %620 = vmatprep.subr.mxu0 0.0
        %621 = vmatpush1.msra.mxu0 0.0
        %622 = vmatprep.subr.mxu0 0.0
        %623 = vmatpush1.msra.mxu0 0.0
        %624 = vmatprep.subr.mxu0 %v590
        %625 = vmatpush1.msra.mxu0 %v589
        %626 = vmatprep.subr.mxu0 %v604
        %627 = vmatpush1.msra.mxu0 %v603
        %628 = vmatprep.subr.mxu0 %v580
        %629 = vmatpush1.msra.mxu0 %v579
        %630 = vmatprep.subr.mxu0 %v570
        %631 = vmatpush1.msra.mxu0 %v569
        %632 = vmatprep.subr.mxu0 %v527
        %633 = vmatpush1.msra.mxu0 %v526
        %634 = vmatprep.subr.mxu0 %v560
        %635 = vmatpush1.msra.mxu0 %v559
        %636 = vmatprep.subr.mxu0 %v550
        %637 = vmatpush1.msra.mxu0 %v549
        %638 = vmatprep.subr.mxu0 %v596
        %639 = vmatpush1.msra.mxu0 %v595
        %640 = vmatprep.subr.mxu0 %v540
        %641 = vmatpush1.msra.mxu0 %v539
        %642 = vmatprep.subr.mxu0 0.0
        %643 = vmatpush2.msra.mxu0 0.0
        %644 = vmatprep.subr.mxu0 0.0
        %645 = vmatpush2.msra.mxu0 0.0
        %646 = vmatprep.subr.mxu0 0.0
        %647 = vmatpush2.msra.mxu0 0.0
        %648 = vmatprep.subr.mxu0 0.0
        %649 = vmatpush2.msra.mxu0 0.0
        %650 = vmatprep.subr.mxu0 0.0
        %651 = vmatpush2.msra.mxu0 0.0
        %652 = vmatprep.subr.mxu0 0.0
        %653 = vmatpush2.msra.mxu0 0.0
        %654 = vmatprep.subr.mxu0 0.0
        %655 = vmatpush2.msra.mxu0 0.0
        %656 = vmatprep.subr.mxu0 0.0
        %657 = vmatpush2.msra.mxu0 0.0
        %658 = vmatprep.subr.mxu0 0.0
        %659 = vmatpush2.msra.mxu0 0.0
        %660 = vmatprep.subr.mxu0 0.0
        %661 = vmatpush2.msra.mxu0 0.0
        %662 = vmatprep.subr.mxu0 0.0
        %663 = vmatpush2.msra.mxu0 0.0
        %664 = vmatprep.subr.mxu0 0.0
        %665 = vmatpush2.msra.mxu0 0.0
        %666 = vmatprep.subr.mxu0 0.0
        %667 = vmatpush2.msra.mxu0 0.0
        %668 = vmatprep.subr.mxu0 0.0
        %669 = vmatpush2.msra.mxu0 0.0
        %670 = vmatprep.subr.mxu0 0.0
        %671 = vmatpush2.msra.mxu0 0.0
        %672 = vmatprep.subr.mxu0 0.0
        %673 = vmatpush2.msra.mxu0 0.0
        %674 = vmatprep.mubr.f32.mxu0 0.0
        %675 = vmatmul.mubr.f32.gmra.mxu0 %v608
        %v676 = vpop.f32.mrf.mxu0
        %v677 = vadd.f32 0.0, %v676
        %v678 = vpop.f32.mrf.mxu0
        %v679 = vadd.f32 0.0, %v678
        %680 = vdwg.mxu0
        %v681 = vld [vmem:[%s5] sm:$0xff]
        %683 = vset.pattern.permute.xlu0 0
        %684 = vperm.xlu0 %683, %v681
        %v685 = vpop.permute.xlu0 %684
        %v687 = vmul.f32 %v677, %v685
        %v688 = vmul.f32 %v679, %v685
        %v689 = vld [vmem:[%s6] sm:$0xff]
        %691 = vset.pattern.permute.xlu0 0
        %692 = vperm.xlu0 %691, %v689
        %v693 = vpop.permute.xlu0 %692
        %v695 = vadd.f32 %v687, %v693
        %v696 = vadd.f32 %v688, %v693
        %v697 = vadd.f32 %v695, %v290
        %v698 = vadd.f32 %v696, %v291
        %v699 = vmax.f32 %v697, 0.0
        %v700 = vmax.f32 %v698, 0.0
        %701 = vst [vmem:[%s284] sm:$0xff] %v699
        %702 = vst [vmem:[%s284 + $0x8] sm:$0xff] %v700
        %s703 = sand.u32 %s182, 1
        %s704 = scalar_lea.sflag [#allocation4], %s703
        %s705 = sand.u32 %s182, 1
        %s706 = smul.addr %s705, 16
        %s707 = scalar_lea.vmem [#allocation5], %s706
        // Predicated region
        $region53: #{tpu_custom_call.1} parent=47 // pred_check
          %p708 = pneg %p192
        $region54: #{tpu_custom_call.1} parent=47 // pred_check_branch
          %710 = sbr.rel (%p708) target = $region56
        $region55: #{tpu_custom_call.1} parent=47 // pred_region
          %s712 = ssub.s32 256, 256
          %713 = vsyncadd %s704, %s712
          %s714 = smul.addr %s22, 2
          %s715 = smul.addr %s714, 128
          %s716 = scalar_lea.hbm %s7, %s715
          %s718 = sshll.u32 %s707, 4
          %s719 = int_to_ptr.vmem [resolvable:$true] %s718
          %721 = dma.vmem_to_hbm [thread:$0]  %s719, 256, %s716, %s704
        $region56: #{tpu_custom_call.1} parent=47 // pred_fallthru
          _
      $region48: #{tpu_custom_call.1} parent=5 // pred_fallthru
        _
      %p722 = scmp.le.s32.totalorder 2, %s17
      // Predicated region
      $region57: #{tpu_custom_call.1} parent=5 // pred_check
        %p723 = pneg %p722
      $region58: #{tpu_custom_call.1} parent=5 // pred_check_branch
        %725 = sbr.rel (%p723) target = $region60
      $region59: #{tpu_custom_call.1} parent=5 // pred_region
        %s726 = ssub.s32 %s17, 2
        // Predicated region
        $region61: #{tpu_custom_call.1} parent=59 // pred_check
          %p727 = pneg %p198
        $region62: #{tpu_custom_call.1} parent=59 // pred_check_branch
          %729 = sbr.rel (%p727) target = $region64
        $region63: #{tpu_custom_call.1} parent=59 // pred_region
          %s730 = sand.u32 %s183, 1
          %s731 = scalar_lea.sflag [#allocation4], %s730
          %s732 = sand.u32 %s183, 1
          %s733 = smul.addr %s732, 16
          %s734 = scalar_lea.vmem [#allocation5], %s733
          %735 = dma.done %s731, 256
        $region64: #{tpu_custom_call.1} parent=59 // pred_fallthru
          _
      $region60: #{tpu_custom_call.1} parent=5 // pred_fallthru
        _
    $region6: #{tpu_custom_call.1} parent=1 // loop_footer
      %s21 = sadd.s32 1, %s17
    $region7: #{tpu_custom_call.1} parent=1 // loop_footer_branch
      %16 = sbr.rel target = $region3
    $region8: #{tpu_custom_call.1} parent=1 // loop_exit
      _
    %736 = vsyncpa [#allocation3], 1
    %s737 = scalar_lea.sflag [#allocation3], 1
    %738 = vsyncpa %s737, 1
    %739 = vsyncpa [#allocation4], 1
    %s740 = scalar_lea.sflag [#allocation4], 1
    %741 = vsyncpa %s740, 1

</llo_original>
